<compile_context>
chip_gen: v6e
topology: v6e:2x2x1
jax: 0.10.0
libtpu: 0.0.40
codegen_flags: <defaults>
</compile_context>

<pallas_src>
import jax
import jax.numpy as jnp
from jax import lax
from jax.experimental import pallas as pl
from jax.experimental.pallas import tpu as pltpu


def _round_up(x, m):
    return ((x + m - 1) // m) * m


def _vmem_capacity_bytes():
    """Physical VMEM per TensorCore; conservative fallback if unknown."""
    try:
        info = pltpu.get_tpu_info()
        cap = getattr(info, "vmem_capacity_bytes", None)
        if cap:
            return int(cap)
    except Exception:
        pass
    return 64 * 1024 * 1024  # v7x per-TC value -- smallest of any generation


def _fit_tile(dim, t_max, align):
    """Largest aligned tile <= t_max; when dim > t_max, equalize the chunks so
    the trailing block is not mostly padding (same block count, less waste)."""
    dim_a = _round_up(max(dim, 1), align)
    if dim_a <= t_max:
        return dim_a
    n_blocks = -(-dim_a // t_max)               # cdiv
    return _round_up(-(-dim_a // n_blocks), align)


def _make_linear_ard_kernel(tk, scale_x, use_bf16):
    mxu_dtype = jnp.bfloat16 if use_bf16 else None

    def kernel(x_ref, x2_ref, lv_ref, o_ref):
        k = pl.program_id(2)

        # Zero the resident accumulator block on the first K tile.
        @pl.when(k == 0)
        def _():
            o_ref[...] = jnp.zeros_like(o_ref)

        # log_variance is resident in VMEM; slice this K-chunk (no per-step DMA).
        start = pl.multiple_of(k * tk, tk)
        scale = jnp.exp(lv_ref[:, pl.ds(start, tk)])        # (1, tk)  -> EUP

        a = x_ref[...]                                       # (tm, tk)
        b = x2_ref[...]                                      # (tn, tk)
        # Fold exp(lv) into the operand with the smaller tile (fewer VPU muls).
        if scale_x:
            a = a * scale
        else:
            b = b * scale

        if mxu_dtype is not None:                            # opt-in bf16 MXU path
            a = a.astype(mxu_dtype)
            b = b.astype(mxu_dtype)

        # Contract the last dims directly; X2 tile stays in natural layout.
        o_ref[...] += lax.dot_general(
            a, b,
            dimension_numbers=(((1,), (1,)), ((), ())),
            preferred_element_type=jnp.float32,
        )

    return kernel


def linear_ard_forward(X, X2, log_variance, *, ARD=True, use_bf16=False,
                       tm_max=None, tn_max=None, tk_max=None):
    """Pallas implementation of LinearARD.forward (ARD=True path).

    X:  (N, D) float32
    X2: (M, D) float32 or None (then X2 := X, matching the torch ARD branch)
    log_variance: (D,) float32
    use_bf16: cast matmul operands to bf16 (f32 accumulation) -- opt-in
              precision/speed tradeoff.
    """
    if not ARD:
        # TODO(synk): non-ARD branch (mm(X, X2.T) * exp(log_variance)) relies on
        # torch broadcasting that only holds when M == D; not implemented.
        raise NotImplementedError("Only ARD=True path is implemented.")

    if X2 is None:
        # TODO(synk): Gram-matrix path could exploit symmetry (only j >= i tiles
        # + mirror) for ~2x less MXU work and HBM traffic.
        X2 = X

    N, D = X.shape
    M, D2 = X2.shape
    assert D == D2 and log_variance.shape == (D,)

    # Generation-aware default tiles / VMEM budget.
    vmem_bytes = _vmem_capacity_bytes()
    if vmem_bytes >= 96 * 1024 * 1024:          # v5e / v6e (128 MiB VMEM)
        d_tm, d_tn, d_tk = 1024, 1024, 2048     # ~40 MiB double-buffered
    else:                                       # v7x (64 MiB per-TC VMEM)
        d_tm, d_tn, d_tk = 1024, 1024, 1024     # ~24 MiB double-buffered
    tm_max = d_tm if tm_max is None else tm_max
    tn_max = d_tn if tn_max is None else tn_max
    tk_max = d_tk if tk_max is None else tk_max

    # Tile sizes: (8, 128) layout rules, lane-dense output, equalized edges.
    tm = _fit_tile(N, tm_max, 8)
    tn = _fit_tile(M, tn_max, 128)
    tk = _fit_tile(D, tk_max, 128)

    # Megacore: prefer >= 2 (i, j) tiles so ("parallel", "parallel") can shard
    # across the 2 TensorCores on v7x.  Only split reasonably large dims.
    def _halve(t, align):
        return max(align, _round_up(t // 2, align))

    for _ in range(4):
        if pl.cdiv(N, tm) * pl.cdiv(M, tn) >= 2:
            break
        if tm >= tn and tm > 256:
            tm = _halve(tm, 8)
        elif tn > 256:
            tn = _halve(tn, 128)
        else:
            break

    # Only the reduction axis is zero-padded: garbage in the contraction would
    # corrupt every output element.  Ragged N / M are handled by partial edge
    # blocks (masked loads / stores), so no wrapper copy of X / X2 is needed.
    D_pad = _round_up(D, tk)
    Xp, X2p, lvp = X, X2, log_variance
    if D_pad != D:
        Xp = jnp.zeros((N, D_pad), X.dtype).at[:, :D].set(X)
        X2p = jnp.zeros((M, D_pad), X2.dtype).at[:, :D].set(X2)
        # exp(0) = 1 in the pad region, but the padded X columns are zero anyway.
        lvp = jnp.zeros((D_pad,), log_variance.dtype).at[:D].set(log_variance)
    lv2d = lvp.reshape(1, D_pad)

    grid = (pl.cdiv(N, tm), pl.cdiv(M, tn), D_pad // tk)

    # Double-buffered f32 footprint + headroom for Mosaic internal scratch.
    footprint = 2 * 4 * (tm * tk + tn * tk + tm * tn) + 2 * 4 * D_pad
    vmem_limit = min(footprint + 16 * 1024 * 1024, int(vmem_bytes * 0.75))
    vmem_limit = max(vmem_limit, 32 * 1024 * 1024)

    scale_x = tm <= tn   # scale whichever operand has the smaller tile
    kernel = _make_linear_ard_kernel(tk, scale_x, use_bf16)

    cost = pl.CostEstimate(
        flops=2 * N * M * D_pad,
        transcendentals=D_pad,
        bytes_accessed=4 * (N * D_pad + M * D_pad + N * M),
    )

    out = pl.pallas_call(
        kernel,
        out_shape=jax.ShapeDtypeStruct((N, M), jnp.float32),
        grid_spec=pltpu.PrefetchScalarGridSpec(
            num_scalar_prefetch=0,
            grid=grid,
            in_specs=[
                pl.BlockSpec((tm, tk), lambda i, j, k: (i, k)),     # X tile
                pl.BlockSpec((tn, tk), lambda i, j, k: (j, k)),     # X2 tile
                pl.BlockSpec((1, D_pad), lambda i, j, k: (0, 0)),   # lv (resident)
            ],
            # Block index constant along k => output is a resident accumulator.
            out_specs=pl.BlockSpec((tm, tn), lambda i, j, k: (i, j)),
        ),
        compiler_params=pltpu.CompilerParams(
            dimension_semantics=("parallel", "parallel", "arbitrary"),
            vmem_limit_bytes=int(vmem_limit),
        ),
        cost_estimate=cost,
    )(Xp, X2p, lv2d)

    return out


if __name__ == "__main__":
    key = jax.random.PRNGKey(0)
    k1, k2, k3 = jax.random.split(key, 3)

    N, M, D = 16, 8, 256
    X = jax.random.normal(k1, (N, D), dtype=jnp.float32)
    X2 = jax.random.normal(k2, (M, D), dtype=jnp.float32)
    # torch __init__ default: log_variance = ones(D); perturb deterministically
    # so the per-feature scaling is non-trivial.
    log_variance = jnp.ones((D,), dtype=jnp.float32) + 0.1 * jax.random.normal(
        k3, (D,), dtype=jnp.float32)

    rv = jnp.sqrt(jnp.exp(log_variance))
    ref = (X * rv) @ (X2 * rv).T
    ref_self = (X * rv) @ (X * rv).T

    # Default f32 path.
    out = jax.block_until_ready(linear_ard_forward(X, X2, log_variance))
    assert out.shape == (N, M)
    assert jnp.allclose(out, ref, atol=1e-4, rtol=1e-4), "mismatch vs reference"

    # X2=None path (Gram matrix of X), matching the torch ARD branch.
    out_self = jax.block_until_ready(linear_ard_forward(X, None, log_variance))
    assert jnp.allclose(out_self, ref_self, atol=1e-4, rtol=1e-4), "self-kernel mismatch"

    # Ragged shapes: exercises partial N/M edge blocks (no wrapper pad copy)
    # and the D/reduction-axis zero-pad path.
    Nr, Mr, Dr = 20, 10, 200
    Xr = jax.random.normal(k1, (Nr, Dr), dtype=jnp.float32)
    X2r = jax.random.normal(k2, (Mr, Dr), dtype=jnp.float32)
    lvr = jnp.ones((Dr,), dtype=jnp.float32)
    rvr = jnp.sqrt(jnp.exp(lvr))
    out_r = jax.block_until_ready(linear_ard_forward(Xr, X2r, lvr))
    ref_r = (Xr * rvr) @ (X2r * rvr).T
    assert out_r.shape == (Nr, Mr)
    assert jnp.allclose(out_r, ref_r, atol=1e-4, rtol=1e-4), "ragged-shape mismatch"

    # Opt-in bf16 MXU path (looser tolerance; accumulation stays f32).
    out_bf16 = jax.block_until_ready(
        linear_ard_forward(X, X2, log_variance, use_bf16=True))
    assert jnp.allclose(out_bf16, ref, rtol=5e-2, atol=5e-1), "bf16 path mismatch"

    print("KERNEL_OK")
</pallas_src>

<mosaic_0001>
module attributes {stable_mosaic.version = 11 : i64} {
  func.func @kernel(%arg0: i32, %arg1: i32, %arg2: i32, %arg3: memref<16x256xf32, #tpu.memory_space<vmem>>, %arg4: memref<128x256xf32, #tpu.memory_space<vmem>>, %arg5: memref<1x256xf32, #tpu.memory_space<vmem>>, %arg6: memref<16x128xf32, #tpu.memory_space<vmem>>) attributes {dimension_semantics = [#tpu.dimension_semantics<parallel>, #tpu.dimension_semantics<parallel>, #tpu.dimension_semantics<arbitrary>], iteration_bounds = array<i64: 1, 1, 1>, scalar_prefetch = 0 : i64, scratch_operands = 0 : i64, tpu.core_type = #tpu.core_type<tc>, window_params = [{transform_indices = @transform_0, window_bounds = array<i64: 16, 256>}, {transform_indices = @transform_1, window_bounds = array<i64: 128, 256>}, {pipeline_mode = #tpu.pipeline_mode<synchronous>, transform_indices = @transform_2, window_bounds = array<i64: 1, 256>}, {transform_indices = @transform_3, window_bounds = array<i64: 16, 128>}]} {
    %c0_i32 = arith.constant 0 : i32
    %0 = arith.cmpi eq, %arg2, %c0_i32 : i32
    %1 = arith.extui %0 : i1 to i32
    %c0_i32_0 = arith.constant 0 : i32
    %2 = arith.cmpi ne, %1, %c0_i32_0 : i32
    scf.if %2 {
      %cst_9 = arith.constant 0.000000e+00 : f32
      %16 = vector.broadcast %cst_9 : f32 to vector<16x128xf32>
      %c0_10 = arith.constant 0 : index
      %c0_11 = arith.constant 0 : index
      %17 = vector.load %arg6[%c0_10, %c0_11] : memref<16x128xf32, #tpu.memory_space<vmem>>, vector<16x128xf32>
      tpu.vector_store %arg6[%c0_10, %c0_11], %16 {strides = array<i32>} : memref<16x128xf32, #tpu.memory_space<vmem>>, vector<16x128xf32>,
    } else {
    }
    %c256_i32 = arith.constant 256 : i32
    %3 = arith.muli %arg2, %c256_i32 : i32
    %4 = tpu.assume_multiple %3, 256 : i32
    %c0 = arith.constant 0 : index
    %5 = arith.index_cast %4 : i32 to index
    %6 = vector.load %arg5[%c0, %5] : memref<1x256xf32, #tpu.memory_space<vmem>>, vector<1x256xf32>
    %7 = math.exp %6 : vector<1x256xf32>
    %c0_1 = arith.constant 0 : index
    %c0_2 = arith.constant 0 : index
    %8 = vector.load %arg3[%c0_1, %c0_2] : memref<16x256xf32, #tpu.memory_space<vmem>>, vector<16x256xf32>
    %c0_3 = arith.constant 0 : index
    %c0_4 = arith.constant 0 : index
    %9 = vector.load %arg4[%c0_3, %c0_4] : memref<128x256xf32, #tpu.memory_space<vmem>>, vector<128x256xf32>
    %10 = vector.broadcast %7 : vector<1x256xf32> to vector<16x256xf32>
    %11 = arith.mulf %8, %10 : vector<16x256xf32>
    %c0_5 = arith.constant 0 : index
    %c0_6 = arith.constant 0 : index
    %12 = vector.load %arg6[%c0_5, %c0_6] : memref<16x128xf32, #tpu.memory_space<vmem>>, vector<16x128xf32>
    %cst = arith.constant dense<0.000000e+00> : vector<16x128xf32>
    %13 = tpu.matmul %11, %9, %cst {dimension_numbers = #tpu.dot_dimension_numbers<[1], [1], [0], [0], [0, 0, 1, 0], [], []>} : vector<16x256xf32>, vector<128x256xf32>, vector<16x128xf32> -> vector<16x128xf32>
    %14 = arith.addf %12, %13 : vector<16x128xf32>
    %c0_7 = arith.constant 0 : index
    %c0_8 = arith.constant 0 : index
    %15 = vector.load %arg6[%c0_7, %c0_8] : memref<16x128xf32, #tpu.memory_space<vmem>>, vector<16x128xf32>
    tpu.vector_store %arg6[%c0_7, %c0_8], %14 {strides = array<i32>} : memref<16x128xf32, #tpu.memory_space<vmem>>, vector<16x128xf32>,
    return
  }
  func.func @transform_0(%arg0: i32, %arg1: i32, %arg2: i32) -> (i32, i32) {
    %c0_i32 = arith.constant 0 : i32
    return %arg0, %arg2 : i32, i32
  }
  func.func @transform_1(%arg0: i32, %arg1: i32, %arg2: i32) -> (i32, i32) {
    %c0_i32 = arith.constant 0 : i32
    return %arg1, %arg2 : i32, i32
  }
  func.func @transform_2(%arg0: i32, %arg1: i32, %arg2: i32) -> (i32, i32) {
    %c0_i32 = arith.constant 0 : i32
    %c0_i32_0 = arith.constant 0 : i32
    %c0_i32_1 = arith.constant 0 : i32
    return %c0_i32, %c0_i32_0 : i32, i32
  }
  func.func @transform_3(%arg0: i32, %arg1: i32, %arg2: i32) -> (i32, i32) {
    %c0_i32 = arith.constant 0 : i32
    return %arg0, %arg1 : i32, i32
  }
}

</mosaic_0001>

<llo_original>
// kernel: tpu_custom_call.1
$region0: #{tpu_custom_call.1}
  #allocation0 [shape = 'u32[]', space=smem, size = 0x4, offset = 0x4, fixed_abs, tag = 'smem constant byte address 0x4 - core index']
  #allocation1 [shape = 'u32[144,128]{1,0:T(1,128)}', space=vmem, size = 0x12000, scoped, tag = 'internal scratch']
  %s0 = inlined_call_operand.hbm [shape: f32[16,256], index: 0, kind: input, shape index: {}]
  %s1 = inlined_call_operand.hbm [shape: f32[8,256], index: 1, kind: input, shape index: {}]
  %s2 = inlined_call_operand.vmem [shape: f32[1,256], index: 2, kind: input, shape index: {}]
  %s3 = inlined_call_operand.vmem [shape: f32[16,8], index: 3, kind: output, shape index: {}]
  %s4 = sld [smem:[#allocation0]]
  $region34: #{tpu_custom_call.1} parent=0
    _
  %s6 = ssub.s32 1, %s4
  %s7 = scalar_select 0, %s6, %s4
  $region1: #{tpu_custom_call.1} parent=0
    #allocation2 [shape = 'u8[16384]{0}', space=vmem, size = 0x4000, scoped, tag = 'input window, operand 0, single buffered']
    #allocation3 [shape = 's32[1]{0}', space=sflag, size = 0x4, scoped, tag = 'scoped memory for tpu_custom_call.1']
    #allocation4 [shape = 'u8[131072]{0}', space=vmem, size = 0x20000, scoped, tag = 'input window, operand 1, single buffered']
    #allocation5 [shape = 's32[1]{0}', space=sflag, size = 0x4, scoped, tag = 'scoped memory for tpu_custom_call.1']
    %8 = vsyncpa [#allocation3], 0
    %9 = vsyncpa [#allocation5], 0
    // Predicated region
    $region2: #{tpu_custom_call.1} parent=1 // pred_check
      _
    $region3: #{tpu_custom_call.1} parent=1 // pred_check_branch
      %11 = sbr.rel (0) target = $region5
    $region4: #{tpu_custom_call.1} parent=1 // pred_region
      %s13 = ssub.s32 512, 512
      %14 = vsyncadd [#allocation3], %s13
      %s15 = sshll.u32 [#allocation2], 4
      %s16 = int_to_ptr.vmem [resolvable:$true] %s15
      %21 = dma.hbm_to_vmem [thread:$0]  %s0, 512, %s16, [#allocation3], 256, 256, 16
    $region5: #{tpu_custom_call.1} parent=1 // pred_fallthru
      _
    // Predicated region
    $region6: #{tpu_custom_call.1} parent=1 // pred_check
      _
    $region7: #{tpu_custom_call.1} parent=1 // pred_check_branch
      %23 = sbr.rel (0) target = $region9
    $region8: #{tpu_custom_call.1} parent=1 // pred_region
      %s25 = ssub.s32 4096, 256
      %26 = vsyncadd [#allocation5], %s25
      %s27 = sshll.u32 [#allocation4], 4
      %s28 = int_to_ptr.vmem [resolvable:$true] %s27
      %33 = dma.hbm_to_vmem [thread:$0]  %s1, 256, %s28, [#allocation5], 256, 256, 16
    $region9: #{tpu_custom_call.1} parent=1 // pred_fallthru
      _
    // Predicated region
    $region10: #{tpu_custom_call.1} parent=1 // pred_check
      _
    $region11: #{tpu_custom_call.1} parent=1 // pred_check_branch
      %35 = sbr.rel (0) target = $region13
    $region12: #{tpu_custom_call.1} parent=1 // pred_region
      _
    $region13: #{tpu_custom_call.1} parent=1 // pred_fallthru
      _
    // Predicated region
    $region14: #{tpu_custom_call.1} parent=1 // pred_check
      _
    $region15: #{tpu_custom_call.1} parent=1 // pred_check_branch
      %37 = sbr.rel (0) target = $region17
    $region16: #{tpu_custom_call.1} parent=1 // pred_region
      %38 = dma.done [#allocation3], 512
    $region17: #{tpu_custom_call.1} parent=1 // pred_fallthru
      _
    // Predicated region
    $region18: #{tpu_custom_call.1} parent=1 // pred_check
      _
    $region19: #{tpu_custom_call.1} parent=1 // pred_check_branch
      %40 = sbr.rel (0) target = $region21
    $region20: #{tpu_custom_call.1} parent=1 // pred_region
      %41 = dma.done [#allocation5], 4096
    $region21: #{tpu_custom_call.1} parent=1 // pred_fallthru
      _
    %p42 = scmp.eq.s32.totalorder 0, 0
    // Predicated region
    $region22: #{tpu_custom_call.1} parent=1 // pred_check
      %p43 = pneg %p42
    $region23: #{tpu_custom_call.1} parent=1 // pred_check_branch
      %45 = sbr.rel (%p43) target = $region25
    $region24: #{tpu_custom_call.1} parent=1 // pred_region
      %46 = vst [vmem:[%s3] sm:$0xff] 0.0
      %47 = vst [vmem:[%s3 + $0x8] sm:$0xff] 0.0
    $region25: #{tpu_custom_call.1} parent=1 // pred_fallthru
      _
    %s48 = smul.u32 0, 256
    %s49 = sshra.s32 %s48, 7
    %s50 = sand.u32 %s48, 127
    %s51 = scalar_lea.vmem %s2, %s49
    %v52 = vld [vmem:[%s51] sm:$0x3]
    %v53 = vmul.f32 %v52, 1.442695
    %v54 = vpow.pop %v53
    %v55 = vld [vmem:[#allocation2] sm:$0xff]
    %v56 = vld [vmem:[#allocation2 + $0x8] sm:$0xff]
    %v57 = vld [vmem:[#allocation2 + $0x10] sm:$0xff]
    %v58 = vld [vmem:[#allocation2 + $0x18] sm:$0xff]
    %v59 = vld [vmem:[#allocation4] sm:$0xff]
    %v60 = vld [vmem:[#allocation4 + $0x8] sm:$0xff]
    %v61 = vld [vmem:[#allocation4 + $0x10] sm:$0xff]
    %v62 = vld [vmem:[#allocation4 + $0x18] sm:$0xff]
    %v63 = vld [vmem:[#allocation4 + $0x20] sm:$0xff]
    %v64 = vld [vmem:[#allocation4 + $0x28] sm:$0xff]
    %v65 = vld [vmem:[#allocation4 + $0x30] sm:$0xff]
    %v66 = vld [vmem:[#allocation4 + $0x38] sm:$0xff]
    %v67 = vld [vmem:[#allocation4 + $0x40] sm:$0xff]
    %v68 = vld [vmem:[#allocation4 + $0x48] sm:$0xff]
    %v69 = vld [vmem:[#allocation4 + $0x50] sm:$0xff]
    %v70 = vld [vmem:[#allocation4 + $0x58] sm:$0xff]
    %v71 = vld [vmem:[#allocation4 + $0x60] sm:$0xff]
    %v72 = vld [vmem:[#allocation4 + $0x68] sm:$0xff]
    %v73 = vld [vmem:[#allocation4 + $0x70] sm:$0xff]
    %v74 = vld [vmem:[#allocation4 + $0x78] sm:$0xff]
    %v75 = vld [vmem:[#allocation4 + $0x80] sm:$0xff]
    %v76 = vld [vmem:[#allocation4 + $0x88] sm:$0xff]
    %v77 = vld [vmem:[#allocation4 + $0x90] sm:$0xff]
    %v78 = vld [vmem:[#allocation4 + $0x98] sm:$0xff]
    %v79 = vld [vmem:[#allocation4 + $0xa0] sm:$0xff]
    %v80 = vld [vmem:[#allocation4 + $0xa8] sm:$0xff]
    %v81 = vld [vmem:[#allocation4 + $0xb0] sm:$0xff]
    %v82 = vld [vmem:[#allocation4 + $0xb8] sm:$0xff]
    %v83 = vld [vmem:[#allocation4 + $0xc0] sm:$0xff]
    %v84 = vld [vmem:[#allocation4 + $0xc8] sm:$0xff]
    %v85 = vld [vmem:[#allocation4 + $0xd0] sm:$0xff]
    %v86 = vld [vmem:[#allocation4 + $0xd8] sm:$0xff]
    %v87 = vld [vmem:[#allocation4 + $0xe0] sm:$0xff]
    %v88 = vld [vmem:[#allocation4 + $0xe8] sm:$0xff]
    %v89 = vld [vmem:[#allocation4 + $0xf0] sm:$0xff]
    %v90 = vld [vmem:[#allocation4 + $0xf8] sm:$0xff]
    %v92 = vlaneseq
    %v93 = vshrl.u32 %v92, 7
    %v94 = vsub.s32 0, %v93
    %v95 = vrot.slane %v54, %v94
    %v96 = vlaneseq
    %v97 = vshrl.u32 %v96, 7
    %v98 = vsub.s32 1, %v97
    %v99 = vrot.slane %v54, %v98
    %v102 = vmul.f32 %v55, %v95
    %v103 = vmul.f32 %v56, %v99
    %v104 = vmul.f32 %v57, %v95
    %v105 = vmul.f32 %v58, %v99
    %v106 = vld [vmem:[%s3] sm:$0xff]
    %v107 = vld [vmem:[%s3 + $0x8] sm:$0xff]
    %108 = vmatprep.subr.mxu0 %v90
    %109 = vmatpush1.xpose.msra.mxu0 %v89
    %110 = vmatprep.subr.mxu0 %v88
    %111 = vmatpush1.xpose.msra.mxu0 %v87
    %112 = vmatprep.subr.mxu0 %v86
    %113 = vmatpush1.xpose.msra.mxu0 %v85
    %114 = vmatprep.subr.mxu0 %v84
    %115 = vmatpush1.xpose.msra.mxu0 %v83
    %116 = vmatprep.subr.mxu0 %v82
    %117 = vmatpush1.xpose.msra.mxu0 %v81
    %118 = vmatprep.subr.mxu0 %v80
    %119 = vmatpush1.xpose.msra.mxu0 %v79
    %120 = vmatprep.subr.mxu0 %v78
    %121 = vmatpush1.xpose.msra.mxu0 %v77
    %122 = vmatprep.subr.mxu0 %v76
    %123 = vmatpush1.xpose.msra.mxu0 %v75
    %124 = vmatprep.subr.mxu0 %v74
    %125 = vmatpush1.xpose.msra.mxu0 %v73
    %126 = vmatprep.subr.mxu0 %v72
    %127 = vmatpush1.xpose.msra.mxu0 %v71
    %128 = vmatprep.subr.mxu0 %v70
    %129 = vmatpush1.xpose.msra.mxu0 %v69
    %130 = vmatprep.subr.mxu0 %v68
    %131 = vmatpush1.xpose.msra.mxu0 %v67
    %132 = vmatprep.subr.mxu0 %v66
    %133 = vmatpush1.xpose.msra.mxu0 %v65
    %134 = vmatprep.subr.mxu0 %v64
    %135 = vmatpush1.xpose.msra.mxu0 %v63
    %136 = vmatprep.subr.mxu0 %v62
    %137 = vmatpush1.xpose.msra.mxu0 %v61
    %138 = vmatprep.subr.mxu0 %v60
    %139 = vmatpush1.xpose.msra.mxu0 %v59
    %140 = vmatprep.subr.mxu0 0.0
    %141 = vmatpush2.xpose.msra.mxu0 0.0
    %142 = vmatprep.subr.mxu0 0.0
    %143 = vmatpush2.xpose.msra.mxu0 0.0
    %144 = vmatprep.subr.mxu0 0.0
    %145 = vmatpush2.xpose.msra.mxu0 0.0
    %146 = vmatprep.subr.mxu0 0.0
    %147 = vmatpush2.xpose.msra.mxu0 0.0
    %148 = vmatprep.subr.mxu0 0.0
    %149 = vmatpush2.xpose.msra.mxu0 0.0
    %150 = vmatprep.subr.mxu0 0.0
    %151 = vmatpush2.xpose.msra.mxu0 0.0
    %152 = vmatprep.subr.mxu0 0.0
    %153 = vmatpush2.xpose.msra.mxu0 0.0
    %154 = vmatprep.subr.mxu0 0.0
    %155 = vmatpush2.xpose.msra.mxu0 0.0
    %156 = vmatprep.subr.mxu0 0.0
    %157 = vmatpush2.xpose.msra.mxu0 0.0
    %158 = vmatprep.subr.mxu0 0.0
    %159 = vmatpush2.xpose.msra.mxu0 0.0
    %160 = vmatprep.subr.mxu0 0.0
    %161 = vmatpush2.xpose.msra.mxu0 0.0
    %162 = vmatprep.subr.mxu0 0.0
    %163 = vmatpush2.xpose.msra.mxu0 0.0
    %164 = vmatprep.subr.mxu0 0.0
    %165 = vmatpush2.xpose.msra.mxu0 0.0
    %166 = vmatprep.subr.mxu0 0.0
    %167 = vmatpush2.xpose.msra.mxu0 0.0
    %168 = vmatprep.subr.mxu0 0.0
    %169 = vmatpush2.xpose.msra.mxu0 0.0
    %170 = vmatprep.subr.mxu0 0.0
    %171 = vmatpush2.xpose.msra.mxu0 0.0
    %172 = vmatprep.mubr.f32.mxu0 %v103
    %173 = vmatmul.mubr.f32.gmra.mxu0 %v102
    %v174 = vpop.f32.mrf.mxu0
    %v175 = vadd.f32 0.0, %v174
    %v176 = vpop.f32.mrf.mxu0
    %177 = vmatprep.mubr.f32.mxu0 %v105
    %178 = vmatmul.mubr.f32.gmra.mxu0 %v104
    %v179 = vpop.f32.mrf.mxu0
    %v180 = vadd.f32 0.0, %v179
    %v181 = vpop.f32.mrf.mxu0
    %182 = vdwg.mxu0
    %v183 = vadd.f32 %v106, %v175
    %v184 = vadd.f32 %v107, %v180
    %185 = vst [vmem:[%s3] sm:$0xff] %v183
    %186 = vst [vmem:[%s3 + $0x8] sm:$0xff] %v184
    // Predicated region
    $region26: #{tpu_custom_call.1} parent=1 // pred_check
      _
    $region27: #{tpu_custom_call.1} parent=1 // pred_check_branch
      %188 = sbr.rel (0) target = $region29
    $region28: #{tpu_custom_call.1} parent=1 // pred_region
      _
    $region29: #{tpu_custom_call.1} parent=1 // pred_fallthru
      _
    // Predicated region
    $region30: #{tpu_custom_call.1} parent=1 // pred_check
      _
    $region31: #{tpu_custom_call.1} parent=1 // pred_check_branch
      %190 = sbr.rel (0) target = $region33
    $region32: #{tpu_custom_call.1} parent=1 // pred_region
      _
    $region33: #{tpu_custom_call.1} parent=1 // pred_fallthru
      _
    %191 = vsyncpa [#allocation3], 1
    %192 = vsyncpa [#allocation5], 1

</llo_original>
